<compile_context>
chip_gen: v6e
topology: v6e:2x2x1
jax: 0.10.0
libtpu: 0.0.40
codegen_flags: <defaults>
</compile_context>

<pallas_src>
import functools

import jax
import jax.numpy as jnp
import numpy as np
from jax import lax
from jax.experimental import pallas as pl
from jax.experimental.pallas import tpu as pltpu


def _rnn_chunk_kernel(x_ref, wih_ref, whh_ref, b_ref, out_ref, h_acc,
                      *, Bp, Tc, T_total):
    """One time-chunk of the tanh-RNN recurrence.

    x_ref  : (Tc*Bp, D)  time-major input slab (row t*Bp + b == x[b, k*Tc+t])
    wih_ref: (D, Hp)     W_ih^T, resident across the grid
    whh_ref: (Hp, Hp)    W_hh^T, resident across the grid
    b_ref  : (1, Hp)     b_ih + b_hh (f32), resident
    out_ref: (Bp, Hp)    final hidden state (written on the last chunk only)
    h_acc  : (Bp, Hp)    f32 VMEM scratch carrying h across chunks
    """
    k = pl.program_id(0)
    last = pl.num_programs(0) - 1

    @pl.when(k == 0)
    def _():
        h_acc[...] = jnp.zeros_like(h_acc)

    # ---- Stage 1 (off the serial path): whole-chunk input projection -------
    # One (Tc*Bp, D) @ (D, Hp) MXU matmul with fused bias.  Time-major layout
    # means each step below reads an aligned (Bp, Hp) tile.
    px = jnp.dot(x_ref[...], wih_ref[...], preferred_element_type=jnp.float32)
    px = px + b_ref[...]                       # (Tc*Bp, Hp) f32

    whh = whh_ref[...]                         # resident in VMEM
    h = h_acc[...]                             # f32 carry from previous chunk

    # ---- Stage 2: sequential recurrence, fully unrolled within the chunk ---
    rem = T_total % Tc
    for t in range(Tc):                        # Tc is a static Python int
        rec = jnp.dot(h.astype(whh.dtype), whh,
                      preferred_element_type=jnp.float32)
        # Static, sublane-aligned slice of px (Bp is a multiple of 8).
        h_new = jnp.tanh(px[t * Bp:(t + 1) * Bp, :] + rec)   # tanh in f32 (EUP)
        if rem != 0 and t >= rem:
            # Only the ragged last chunk can run past T_total; keep h there.
            h_new = jnp.where(k * Tc + t < T_total, h_new, h)
        h = h_new

    h_acc[...] = h

    @pl.when(k == last)
    def _():
        out_ref[...] = h.astype(out_ref.dtype)   # single lane-dense store


def _round_up(v, m):
    return (v + m - 1) // m * m


def rnn_encoder_forward(x, w_ih, w_hh, b_ih, b_hh, *,
                        input_dtype=jnp.bfloat16,
                        recurrent_dtype=jnp.bfloat16,
                        time_chunk=None):
    """Pallas equivalent of `_, h_n = nn.RNN(...)(x); return h_n.squeeze(0)`.

    x:    (B, T, D) float32, batch_first
    w_ih: (H, D), w_hh: (H, H), b_ih/b_hh: (H,)
    Returns (B, H) float32.

    Defaults use bf16 data movement / recurrent matmuls with f32 accumulation
    (recommended on v5e/v6e/v7x); pass input_dtype=recurrent_dtype=jnp.float32
    for a tight match against an f32 reference.
    """
    B, T, D = x.shape
    H = w_ih.shape[0]

    Bp = _round_up(B, 8)       # sublane multiple
    Hp = _round_up(H, 128)     # lane multiple -> dense tiles, unmasked stores

    if time_chunk is None:
        time_chunk = 16        # bounds per-chunk VMEM slab & unroll length
    Tc = max(1, min(int(time_chunk), T))
    num_chunks = -(-T // Tc)
    Tpad = num_chunks * Tc

    # Time-major, batch-padded, flattened input: row t*Bp + b == x[b, t, :].
    # Transpose/pad/reshape happen once in HBM, off the serial path.
    x_tm = jnp.transpose(x, (1, 0, 2))                               # (T, B, D)
    x_tm = jnp.pad(x_tm, ((0, Tpad - T), (0, Bp - B), (0, 0)))       # (Tpad, Bp, D)
    x_tm = x_tm.reshape(Tpad * Bp, D).astype(input_dtype)            # (Tpad*Bp, D)

    wih_t = jnp.pad(jnp.transpose(w_ih), ((0, 0), (0, Hp - H))).astype(input_dtype)        # (D, Hp)
    whh_t = jnp.pad(jnp.transpose(w_hh), ((0, Hp - H), (0, Hp - H))).astype(recurrent_dtype)  # (Hp, Hp)
    bias = jnp.pad((b_ih + b_hh).astype(jnp.float32).reshape(1, H),
                   ((0, 0), (0, Hp - H)))                            # (1, Hp) f32

    kernel = functools.partial(_rnn_chunk_kernel, Bp=Bp, Tc=Tc, T_total=T)

    out_p = pl.pallas_call(
        kernel,
        out_shape=jax.ShapeDtypeStruct((Bp, Hp), jnp.float32),
        grid_spec=pltpu.PrefetchScalarGridSpec(
            num_scalar_prefetch=0,
            grid=(num_chunks,),                                      # time chunks, sequential
            in_specs=[
                pl.BlockSpec((Tc * Bp, D), lambda k: (k, 0)),        # x slab (pipelined)
                pl.BlockSpec((D, Hp), lambda k: (0, 0)),             # W_ih^T (resident)
                pl.BlockSpec((Hp, Hp), lambda k: (0, 0)),            # W_hh^T (resident)
                pl.BlockSpec((1, Hp), lambda k: (0, 0)),             # fused bias (resident)
            ],
            out_specs=pl.BlockSpec((Bp, Hp), lambda k: (0, 0)),      # accumulator-style output
            scratch_shapes=[pltpu.VMEM((Bp, Hp), jnp.float32)],      # carried hidden state
        ),
        compiler_params=pltpu.CompilerParams(
            dimension_semantics=("arbitrary",),                      # serial recurrence
        ),
    )(x_tm, wih_t, whh_t, bias)

    # Padded batch rows accumulate garbage (bias on zero inputs); slice off.
    return out_p[:B, :H]


def _reference_rnn(x, w_ih, w_hh, b_ih, b_hh):
    """Pure-JAX reference matching torch.nn.RNN (tanh, single layer, h0=0)."""
    B, T, D = x.shape
    H = w_ih.shape[0]
    h0 = jnp.zeros((B, H), jnp.float32)

    def step(h, x_t):
        h_new = jnp.tanh(x_t @ w_ih.T + b_ih + h @ w_hh.T + b_hh)
        return h_new, None

    h_final, _ = lax.scan(step, h0, jnp.transpose(x, (1, 0, 2)))
    return h_final


if __name__ == "__main__":
    # Small shapes consistent with the module.
    B, T, D, H = 2, 8, 16, 32

    key = jax.random.PRNGKey(0)
    kx, k1, k2, k3, k4 = jax.random.split(key, 5)

    # torch.nn.RNN initializes all params Uniform(-1/sqrt(H), 1/sqrt(H)).
    bound = 1.0 / np.sqrt(H)
    x = jax.random.normal(kx, (B, T, D), dtype=jnp.float32)
    w_ih = jax.random.uniform(k1, (H, D), jnp.float32, -bound, bound)
    w_hh = jax.random.uniform(k2, (H, H), jnp.float32, -bound, bound)
    b_ih = jax.random.uniform(k3, (H,), jnp.float32, -bound, bound)
    b_hh = jax.random.uniform(k4, (H,), jnp.float32, -bound, bound)

    ref = _reference_rnn(x, w_ih, w_hh, b_ih, b_hh)

    # f32 path: exact-semantics check.
    out_f32 = rnn_encoder_forward(x, w_ih, w_hh, b_ih, b_hh,
                                  input_dtype=jnp.float32,
                                  recurrent_dtype=jnp.float32)
    out_f32 = jax.block_until_ready(out_f32)
    np.testing.assert_allclose(np.asarray(out_f32), np.asarray(ref),
                               rtol=1e-4, atol=1e-4)

    # Default (bf16 inputs / recurrent, f32 accumulate) path: looser tolerance
    # because bf16 rounding of h compounds over the T serial steps.
    out = rnn_encoder_forward(x, w_ih, w_hh, b_ih, b_hh)
    out = jax.block_until_ready(out)
    np.testing.assert_allclose(np.asarray(out), np.asarray(ref),
                               rtol=5e-2, atol=5e-2)

    assert out.shape == (B, H)
    assert out_f32.shape == (B, H)
    print("KERNEL_OK")
</pallas_src>

<mosaic_0001>
module attributes {stable_mosaic.version = 11 : i64} {
  func.func @_rnn_chunk_kernel(%arg0: i32, %arg1: memref<64x16xf32, #tpu.memory_space<vmem>>, %arg2: memref<16x128xf32, #tpu.memory_space<vmem>>, %arg3: memref<128x128xf32, #tpu.memory_space<vmem>>, %arg4: memref<1x128xf32, #tpu.memory_space<vmem>>, %arg5: memref<8x128xf32, #tpu.memory_space<vmem>>, %arg6: memref<8x128xf32, #tpu.memory_space<vmem>>) attributes {dimension_semantics = [#tpu.dimension_semantics<arbitrary>], iteration_bounds = array<i64: 1>, scalar_prefetch = 0 : i64, scratch_operands = 1 : i64, tpu.core_type = #tpu.core_type<tc>, window_params = [{transform_indices = @transform_0, window_bounds = array<i64: 64, 16>}, {pipeline_mode = #tpu.pipeline_mode<synchronous>, transform_indices = @transform_1, window_bounds = array<i64: 16, 128>}, {pipeline_mode = #tpu.pipeline_mode<synchronous>, transform_indices = @transform_2, window_bounds = array<i64: 128, 128>}, {pipeline_mode = #tpu.pipeline_mode<synchronous>, transform_indices = @transform_3, window_bounds = array<i64: 1, 128>}, {pipeline_mode = #tpu.pipeline_mode<synchronous>, transform_indices = @transform_4, window_bounds = array<i64: 8, 128>}]} {
    %c0_i32 = arith.constant 0 : i32
    %0 = arith.cmpi eq, %arg0, %c0_i32 : i32
    %1 = arith.extui %0 : i1 to i32
    %c0_i32_0 = arith.constant 0 : i32
    %2 = arith.cmpi ne, %1, %c0_i32_0 : i32
    scf.if %2 {
      %cst_22 = arith.constant 0.000000e+00 : f32
      %47 = vector.broadcast %cst_22 : f32 to vector<8x128xf32>
      %c0_23 = arith.constant 0 : index
      %c0_24 = arith.constant 0 : index
      %48 = vector.load %arg6[%c0_23, %c0_24] : memref<8x128xf32, #tpu.memory_space<vmem>>, vector<8x128xf32>
      tpu.vector_store %arg6[%c0_23, %c0_24], %47 {strides = array<i32>} : memref<8x128xf32, #tpu.memory_space<vmem>>, vector<8x128xf32>,
    } else {
    }
    %c0 = arith.constant 0 : index
    %c0_1 = arith.constant 0 : index
    %3 = vector.load %arg1[%c0, %c0_1] : memref<64x16xf32, #tpu.memory_space<vmem>>, vector<64x16xf32>
    %c0_2 = arith.constant 0 : index
    %c0_3 = arith.constant 0 : index
    %4 = vector.load %arg2[%c0_2, %c0_3] : memref<16x128xf32, #tpu.memory_space<vmem>>, vector<16x128xf32>
    %cst = arith.constant dense<0.000000e+00> : vector<64x128xf32>
    %5 = tpu.matmul %3, %4, %cst {dimension_numbers = #tpu.dot_dimension_numbers<[1], [0], [0], [1], [0, 0, 1, 1], [], []>} : vector<64x16xf32>, vector<16x128xf32>, vector<64x128xf32> -> vector<64x128xf32>
    %c0_4 = arith.constant 0 : index
    %c0_5 = arith.constant 0 : index
    %6 = vector.load %arg4[%c0_4, %c0_5] : memref<1x128xf32, #tpu.memory_space<vmem>>, vector<1x128xf32>
    %7 = vector.broadcast %6 : vector<1x128xf32> to vector<64x128xf32>
    %8 = arith.addf %5, %7 : vector<64x128xf32>
    %c0_6 = arith.constant 0 : index
    %c0_7 = arith.constant 0 : index
    %9 = vector.load %arg3[%c0_6, %c0_7] : memref<128x128xf32, #tpu.memory_space<vmem>>, vector<128x128xf32>
    %c0_8 = arith.constant 0 : index
    %c0_9 = arith.constant 0 : index
    %10 = vector.load %arg6[%c0_8, %c0_9] : memref<8x128xf32, #tpu.memory_space<vmem>>, vector<8x128xf32>
    %cst_10 = arith.constant dense<0.000000e+00> : vector<8x128xf32>
    %11 = tpu.matmul %10, %9, %cst_10 {dimension_numbers = #tpu.dot_dimension_numbers<[1], [0], [0], [1], [0, 0, 1, 1], [], []>} : vector<8x128xf32>, vector<128x128xf32>, vector<8x128xf32> -> vector<8x128xf32>
    %12 = vector.extract_strided_slice %8 {offsets = [0, 0], sizes = [8, 128], strides = [1, 1]} : vector<64x128xf32> to vector<8x128xf32>
    %13 = arith.addf %12, %11 : vector<8x128xf32>
    %14 = math.tanh %13 : vector<8x128xf32>
    %cst_11 = arith.constant dense<0.000000e+00> : vector<8x128xf32>
    %15 = tpu.matmul %14, %9, %cst_11 {dimension_numbers = #tpu.dot_dimension_numbers<[1], [0], [0], [1], [0, 0, 1, 1], [], []>} : vector<8x128xf32>, vector<128x128xf32>, vector<8x128xf32> -> vector<8x128xf32>
    %16 = vector.extract_strided_slice %8 {offsets = [8, 0], sizes = [8, 128], strides = [1, 1]} : vector<64x128xf32> to vector<8x128xf32>
    %17 = arith.addf %16, %15 : vector<8x128xf32>
    %18 = math.tanh %17 : vector<8x128xf32>
    %cst_12 = arith.constant dense<0.000000e+00> : vector<8x128xf32>
    %19 = tpu.matmul %18, %9, %cst_12 {dimension_numbers = #tpu.dot_dimension_numbers<[1], [0], [0], [1], [0, 0, 1, 1], [], []>} : vector<8x128xf32>, vector<128x128xf32>, vector<8x128xf32> -> vector<8x128xf32>
    %20 = vector.extract_strided_slice %8 {offsets = [16, 0], sizes = [8, 128], strides = [1, 1]} : vector<64x128xf32> to vector<8x128xf32>
    %21 = arith.addf %20, %19 : vector<8x128xf32>
    %22 = math.tanh %21 : vector<8x128xf32>
    %cst_13 = arith.constant dense<0.000000e+00> : vector<8x128xf32>
    %23 = tpu.matmul %22, %9, %cst_13 {dimension_numbers = #tpu.dot_dimension_numbers<[1], [0], [0], [1], [0, 0, 1, 1], [], []>} : vector<8x128xf32>, vector<128x128xf32>, vector<8x128xf32> -> vector<8x128xf32>
    %24 = vector.extract_strided_slice %8 {offsets = [24, 0], sizes = [8, 128], strides = [1, 1]} : vector<64x128xf32> to vector<8x128xf32>
    %25 = arith.addf %24, %23 : vector<8x128xf32>
    %26 = math.tanh %25 : vector<8x128xf32>
    %cst_14 = arith.constant dense<0.000000e+00> : vector<8x128xf32>
    %27 = tpu.matmul %26, %9, %cst_14 {dimension_numbers = #tpu.dot_dimension_numbers<[1], [0], [0], [1], [0, 0, 1, 1], [], []>} : vector<8x128xf32>, vector<128x128xf32>, vector<8x128xf32> -> vector<8x128xf32>
    %28 = vector.extract_strided_slice %8 {offsets = [32, 0], sizes = [8, 128], strides = [1, 1]} : vector<64x128xf32> to vector<8x128xf32>
    %29 = arith.addf %28, %27 : vector<8x128xf32>
    %30 = math.tanh %29 : vector<8x128xf32>
    %cst_15 = arith.constant dense<0.000000e+00> : vector<8x128xf32>
    %31 = tpu.matmul %30, %9, %cst_15 {dimension_numbers = #tpu.dot_dimension_numbers<[1], [0], [0], [1], [0, 0, 1, 1], [], []>} : vector<8x128xf32>, vector<128x128xf32>, vector<8x128xf32> -> vector<8x128xf32>
    %32 = vector.extract_strided_slice %8 {offsets = [40, 0], sizes = [8, 128], strides = [1, 1]} : vector<64x128xf32> to vector<8x128xf32>
    %33 = arith.addf %32, %31 : vector<8x128xf32>
    %34 = math.tanh %33 : vector<8x128xf32>
    %cst_16 = arith.constant dense<0.000000e+00> : vector<8x128xf32>
    %35 = tpu.matmul %34, %9, %cst_16 {dimension_numbers = #tpu.dot_dimension_numbers<[1], [0], [0], [1], [0, 0, 1, 1], [], []>} : vector<8x128xf32>, vector<128x128xf32>, vector<8x128xf32> -> vector<8x128xf32>
    %36 = vector.extract_strided_slice %8 {offsets = [48, 0], sizes = [8, 128], strides = [1, 1]} : vector<64x128xf32> to vector<8x128xf32>
    %37 = arith.addf %36, %35 : vector<8x128xf32>
    %38 = math.tanh %37 : vector<8x128xf32>
    %cst_17 = arith.constant dense<0.000000e+00> : vector<8x128xf32>
    %39 = tpu.matmul %38, %9, %cst_17 {dimension_numbers = #tpu.dot_dimension_numbers<[1], [0], [0], [1], [0, 0, 1, 1], [], []>} : vector<8x128xf32>, vector<128x128xf32>, vector<8x128xf32> -> vector<8x128xf32>
    %40 = vector.extract_strided_slice %8 {offsets = [56, 0], sizes = [8, 128], strides = [1, 1]} : vector<64x128xf32> to vector<8x128xf32>
    %41 = arith.addf %40, %39 : vector<8x128xf32>
    %42 = math.tanh %41 : vector<8x128xf32>
    %c0_18 = arith.constant 0 : index
    %c0_19 = arith.constant 0 : index
    %43 = vector.load %arg6[%c0_18, %c0_19] : memref<8x128xf32, #tpu.memory_space<vmem>>, vector<8x128xf32>
    tpu.vector_store %arg6[%c0_18, %c0_19], %42 {strides = array<i32>} : memref<8x128xf32, #tpu.memory_space<vmem>>, vector<8x128xf32>,
    %c0_i32_20 = arith.constant 0 : i32
    %44 = arith.cmpi eq, %arg0, %c0_i32_20 : i32
    %45 = arith.extui %44 : i1 to i32
    %c0_i32_21 = arith.constant 0 : i32
    %46 = arith.cmpi ne, %45, %c0_i32_21 : i32
    scf.if %46 {
      %c0_22 = arith.constant 0 : index
      %c0_23 = arith.constant 0 : index
      %47 = vector.load %arg5[%c0_22, %c0_23] : memref<8x128xf32, #tpu.memory_space<vmem>>, vector<8x128xf32>
      tpu.vector_store %arg5[%c0_22, %c0_23], %42 {strides = array<i32>} : memref<8x128xf32, #tpu.memory_space<vmem>>, vector<8x128xf32>,
    } else {
    }
    return
  }
  func.func @transform_0(%arg0: i32) -> (i32, i32) {
    %c0_i32 = arith.constant 0 : i32
    %c0_i32_0 = arith.constant 0 : i32
    return %arg0, %c0_i32 : i32, i32
  }
  func.func @transform_1(%arg0: i32) -> (i32, i32) {
    %c0_i32 = arith.constant 0 : i32
    %c0_i32_0 = arith.constant 0 : i32
    %c0_i32_1 = arith.constant 0 : i32
    return %c0_i32, %c0_i32_0 : i32, i32
  }
  func.func @transform_2(%arg0: i32) -> (i32, i32) {
    %c0_i32 = arith.constant 0 : i32
    %c0_i32_0 = arith.constant 0 : i32
    %c0_i32_1 = arith.constant 0 : i32
    return %c0_i32, %c0_i32_0 : i32, i32
  }
  func.func @transform_3(%arg0: i32) -> (i32, i32) {
    %c0_i32 = arith.constant 0 : i32
    %c0_i32_0 = arith.constant 0 : i32
    %c0_i32_1 = arith.constant 0 : i32
    return %c0_i32, %c0_i32_0 : i32, i32
  }
  func.func @transform_4(%arg0: i32) -> (i32, i32) {
    %c0_i32 = arith.constant 0 : i32
    %c0_i32_0 = arith.constant 0 : i32
    %c0_i32_1 = arith.constant 0 : i32
    return %c0_i32, %c0_i32_0 : i32, i32
  }
}

</mosaic_0001>

<llo_original>
// kernel: tpu_custom_call.1
$region0: #{tpu_custom_call.1}
  #allocation0 [shape = 'u32[]', space=smem, size = 0x4, offset = 0x4, fixed_abs, tag = 'smem constant byte address 0x4 - core index']
  #allocation1 [shape = 'u32[144,128]{1,0:T(1,128)}', space=vmem, size = 0x12000, scoped, tag = 'internal scratch']
  #allocation2 [shape = 'f32[8,128]{1,0:T(8,128)}', space=vmem, size = 0x1000, scoped, tag = 'scratch operand']
  %s0 = inlined_call_operand.vmem [shape: f32[64,16], index: 0, kind: input, shape index: {}]
  %s1 = inlined_call_operand.vmem [shape: f32[16,128], index: 1, kind: input, shape index: {}]
  %s2 = inlined_call_operand.hbm [shape: f32[128,128], index: 2, kind: input, shape index: {}]
  %s3 = inlined_call_operand.vmem [shape: f32[1,128], index: 3, kind: input, shape index: {}]
  %s4 = inlined_call_operand.hbm [shape: f32[8,128], index: 4, kind: output, shape index: {}]
  %s5 = sld [smem:[#allocation0]]
  $region38: #{tpu_custom_call.1} parent=0
    _
  %s7 = ssub.s32 1, %s5
  %s8 = scalar_select 0, %s7, %s5
  $region1: #{tpu_custom_call.1} parent=0
    #allocation3 [shape = 'u8[65536]{0}', space=vmem, size = 0x10000, scoped, tag = 'input window, operand 2, single buffered']
    #allocation4 [shape = 's32[1]{0}', space=sflag, size = 0x4, scoped, tag = 'scoped memory for tpu_custom_call.1']
    #allocation5 [shape = 's32[1]{0}', space=sflag, size = 0x4, scoped, tag = 'scoped memory for tpu_custom_call.1']
    #allocation6 [shape = 'u8[4096]{0}', space=vmem, size = 0x1000, scoped, tag = 'output window, operand 0, single buffered']
    %9 = vsyncpa [#allocation4], 0
    %10 = vsyncpa [#allocation5], 0
    // Predicated region
    $region2: #{tpu_custom_call.1} parent=1 // pred_check
      _
    $region3: #{tpu_custom_call.1} parent=1 // pred_check_branch
      %12 = sbr.rel (0) target = $region5
    $region4: #{tpu_custom_call.1} parent=1 // pred_region
      _
    $region5: #{tpu_custom_call.1} parent=1 // pred_fallthru
      _
    // Predicated region
    $region6: #{tpu_custom_call.1} parent=1 // pred_check
      _
    $region7: #{tpu_custom_call.1} parent=1 // pred_check_branch
      %14 = sbr.rel (0) target = $region9
    $region8: #{tpu_custom_call.1} parent=1 // pred_region
      _
    $region9: #{tpu_custom_call.1} parent=1 // pred_fallthru
      _
    // Predicated region
    $region10: #{tpu_custom_call.1} parent=1 // pred_check
      _
    $region11: #{tpu_custom_call.1} parent=1 // pred_check_branch
      %16 = sbr.rel (0) target = $region13
    $region12: #{tpu_custom_call.1} parent=1 // pred_region
      %s18 = ssub.s32 2048, 2048
      %19 = vsyncadd [#allocation4], %s18
      %s20 = sshll.u32 [#allocation3], 4
      %s21 = int_to_ptr.vmem [resolvable:$true] %s20
      %26 = dma.hbm_to_vmem [thread:$0]  %s2, 2048, %s21, [#allocation4], 128, 128, 8
    $region13: #{tpu_custom_call.1} parent=1 // pred_fallthru
      _
    // Predicated region
    $region14: #{tpu_custom_call.1} parent=1 // pred_check
      _
    $region15: #{tpu_custom_call.1} parent=1 // pred_check_branch
      %28 = sbr.rel (0) target = $region17
    $region16: #{tpu_custom_call.1} parent=1 // pred_region
      _
    $region17: #{tpu_custom_call.1} parent=1 // pred_fallthru
      _
    // Predicated region
    $region18: #{tpu_custom_call.1} parent=1 // pred_check
      _
    $region19: #{tpu_custom_call.1} parent=1 // pred_check_branch
      %30 = sbr.rel (0) target = $region21
    $region20: #{tpu_custom_call.1} parent=1 // pred_region
      %31 = dma.done [#allocation4], 2048
    $region21: #{tpu_custom_call.1} parent=1 // pred_fallthru
      _
    %p32 = scmp.eq.s32.totalorder 0, 0
    // Predicated region
    $region22: #{tpu_custom_call.1} parent=1 // pred_check
      %p33 = pneg %p32
    $region23: #{tpu_custom_call.1} parent=1 // pred_check_branch
      %35 = sbr.rel (%p33) target = $region25
    $region24: #{tpu_custom_call.1} parent=1 // pred_region
      %36 = vst [vmem:[#allocation2] sm:$0xff] 0.0
    $region25: #{tpu_custom_call.1} parent=1 // pred_fallthru
      _
    %v37 = vld [vmem:[%s0] sm:$0xff]
    %v38 = vld [vmem:[%s0 + $0x8] sm:$0xff]
    %v39 = vld [vmem:[%s0 + $0x10] sm:$0xff]
    %v40 = vld [vmem:[%s0 + $0x18] sm:$0xff]
    %v41 = vld [vmem:[%s0 + $0x20] sm:$0xff]
    %v42 = vld [vmem:[%s0 + $0x28] sm:$0xff]
    %v43 = vld [vmem:[%s0 + $0x30] sm:$0xff]
    %v44 = vld [vmem:[%s0 + $0x38] sm:$0xff]
    %v45 = vld [vmem:[%s1] sm:$0xff]
    %v46 = vld [vmem:[%s1 + $0x8] sm:$0xff]
    %v47 = vld [vmem:[%s3] sm:$0x1]
    %v49 = vlaneseq
    %v50 = vshrl.u32 %v49, 7
    %v51 = vsub.s32 0, %v50
    %v52 = vrot.slane %v47, %v51
    %vm54 = vcmask 130048
    %v56 = vsel %vm54, %v37, 0
    %v59 = vsel %vm54, %v38, 0
    %v62 = vsel %vm54, %v39, 0
    %v65 = vsel %vm54, %v40, 0
    %v68 = vsel %vm54, %v41, 0
    %v71 = vsel %vm54, %v42, 0
    %v74 = vsel %vm54, %v43, 0
    %v77 = vsel %vm54, %v44, 0
    %79 = vmatprep.subr.mxu0 0.0
    %80 = vmatpush1.msra.mxu0 0.0
    %81 = vmatprep.subr.mxu0 0.0
    %82 = vmatpush1.msra.mxu0 0.0
    %83 = vmatprep.subr.mxu0 0.0
    %84 = vmatpush1.msra.mxu0 0.0
    %85 = vmatprep.subr.mxu0 0.0
    %86 = vmatpush1.msra.mxu0 0.0
    %87 = vmatprep.subr.mxu0 0.0
    %88 = vmatpush1.msra.mxu0 0.0
    %89 = vmatprep.subr.mxu0 0.0
    %90 = vmatpush1.msra.mxu0 0.0
    %91 = vmatprep.subr.mxu0 0.0
    %92 = vmatpush1.msra.mxu0 0.0
    %93 = vmatprep.subr.mxu0 0.0
    %94 = vmatpush1.msra.mxu0 0.0
    %95 = vmatprep.subr.mxu0 0.0
    %96 = vmatpush1.msra.mxu0 0.0
    %97 = vmatprep.subr.mxu0 0.0
    %98 = vmatpush1.msra.mxu0 0.0
    %99 = vmatprep.subr.mxu0 0.0
    %100 = vmatpush1.msra.mxu0 0.0
    %101 = vmatprep.subr.mxu0 0.0
    %102 = vmatpush1.msra.mxu0 0.0
    %103 = vmatprep.subr.mxu0 0.0
    %104 = vmatpush1.msra.mxu0 0.0
    %105 = vmatprep.subr.mxu0 0.0
    %106 = vmatpush1.msra.mxu0 0.0
    %107 = vmatprep.subr.mxu0 0.0
    %108 = vmatpush1.msra.mxu0 %v46
    %109 = vmatprep.subr.mxu0 0.0
    %110 = vmatpush1.msra.mxu0 %v45
    %111 = vmatprep.subr.mxu0 0.0
    %112 = vmatpush2.msra.mxu0 0.0
    %113 = vmatprep.subr.mxu0 0.0
    %114 = vmatpush2.msra.mxu0 0.0
    %115 = vmatprep.subr.mxu0 0.0
    %116 = vmatpush2.msra.mxu0 0.0
    %117 = vmatprep.subr.mxu0 0.0
    %118 = vmatpush2.msra.mxu0 0.0
    %119 = vmatprep.subr.mxu0 0.0
    %120 = vmatpush2.msra.mxu0 0.0
    %121 = vmatprep.subr.mxu0 0.0
    %122 = vmatpush2.msra.mxu0 0.0
    %123 = vmatprep.subr.mxu0 0.0
    %124 = vmatpush2.msra.mxu0 0.0
    %125 = vmatprep.subr.mxu0 0.0
    %126 = vmatpush2.msra.mxu0 0.0
    %127 = vmatprep.subr.mxu0 0.0
    %128 = vmatpush2.msra.mxu0 0.0
    %129 = vmatprep.subr.mxu0 0.0
    %130 = vmatpush2.msra.mxu0 0.0
    %131 = vmatprep.subr.mxu0 0.0
    %132 = vmatpush2.msra.mxu0 0.0
    %133 = vmatprep.subr.mxu0 0.0
    %134 = vmatpush2.msra.mxu0 0.0
    %135 = vmatprep.subr.mxu0 0.0
    %136 = vmatpush2.msra.mxu0 0.0
    %137 = vmatprep.subr.mxu0 0.0
    %138 = vmatpush2.msra.mxu0 0.0
    %139 = vmatprep.subr.mxu0 0.0
    %140 = vmatpush2.msra.mxu0 0.0
    %141 = vmatprep.subr.mxu0 0.0
    %142 = vmatpush2.msra.mxu0 0.0
    %143 = vmatprep.mubr.f32.mxu0 0.0
    %144 = vmatmul.mubr.f32.gmra.mxu0 %v56
    %v145 = vpop.f32.mrf.mxu0
    %v146 = vadd.f32 %v52, %v145
    %v147 = vpop.f32.mrf.mxu0
    %148 = vmatprep.mubr.f32.mxu0 0.0
    %149 = vmatmul.mubr.f32.gmra.mxu0 %v59
    %v150 = vpop.f32.mrf.mxu0
    %v151 = vadd.f32 %v52, %v150
    %v152 = vpop.f32.mrf.mxu0
    %153 = vmatprep.mubr.f32.mxu0 0.0
    %154 = vmatmul.mubr.f32.gmra.mxu0 %v62
    %v155 = vpop.f32.mrf.mxu0
    %v156 = vadd.f32 %v52, %v155
    %v157 = vpop.f32.mrf.mxu0
    %158 = vmatprep.mubr.f32.mxu0 0.0
    %159 = vmatmul.mubr.f32.gmra.mxu0 %v65
    %v160 = vpop.f32.mrf.mxu0
    %v161 = vadd.f32 %v52, %v160
    %v162 = vpop.f32.mrf.mxu0
    %163 = vmatprep.mubr.f32.mxu0 0.0
    %164 = vmatmul.mubr.f32.gmra.mxu0 %v68
    %v165 = vpop.f32.mrf.mxu0
    %v166 = vadd.f32 %v52, %v165
    %v167 = vpop.f32.mrf.mxu0
    %168 = vmatprep.mubr.f32.mxu0 0.0
    %169 = vmatmul.mubr.f32.gmra.mxu0 %v71
    %v170 = vpop.f32.mrf.mxu0
    %v171 = vadd.f32 %v52, %v170
    %v172 = vpop.f32.mrf.mxu0
    %173 = vmatprep.mubr.f32.mxu0 0.0
    %174 = vmatmul.mubr.f32.gmra.mxu0 %v74
    %v175 = vpop.f32.mrf.mxu0
    %v176 = vadd.f32 %v52, %v175
    %v177 = vpop.f32.mrf.mxu0
    %178 = vmatprep.mubr.f32.mxu0 0.0
    %179 = vmatmul.mubr.f32.gmra.mxu0 %v77
    %v180 = vpop.f32.mrf.mxu0
    %v181 = vadd.f32 %v52, %v180
    %v182 = vpop.f32.mrf.mxu0
    %183 = vdwg.mxu0
    %v184 = vld [vmem:[#allocation3] sm:$0xff]
    %v185 = vld [vmem:[#allocation3 + $0x8] sm:$0xff]
    %v186 = vld [vmem:[#allocation3 + $0x10] sm:$0xff]
    %v187 = vld [vmem:[#allocation3 + $0x18] sm:$0xff]
    %v188 = vld [vmem:[#allocation3 + $0x20] sm:$0xff]
    %v189 = vld [vmem:[#allocation3 + $0x28] sm:$0xff]
    %v190 = vld [vmem:[#allocation3 + $0x30] sm:$0xff]
    %v191 = vld [vmem:[#allocation3 + $0x38] sm:$0xff]
    %v192 = vld [vmem:[#allocation3 + $0x40] sm:$0xff]
    %v193 = vld [vmem:[#allocation3 + $0x48] sm:$0xff]
    %v194 = vld [vmem:[#allocation3 + $0x50] sm:$0xff]
    %v195 = vld [vmem:[#allocation3 + $0x58] sm:$0xff]
    %v196 = vld [vmem:[#allocation3 + $0x60] sm:$0xff]
    %v197 = vld [vmem:[#allocation3 + $0x68] sm:$0xff]
    %v198 = vld [vmem:[#allocation3 + $0x70] sm:$0xff]
    %v199 = vld [vmem:[#allocation3 + $0x78] sm:$0xff]
    %v200 = vld [vmem:[#allocation2] sm:$0xff]
    %201 = vmatprep.subr.mxu0 0.0
    %202 = vmatpush1.msra.mxu0 %v199
    %203 = vmatprep.subr.mxu0 0.0
    %204 = vmatpush1.msra.mxu0 %v198
    %205 = vmatprep.subr.mxu0 0.0
    %206 = vmatpush1.msra.mxu0 %v197
    %207 = vmatprep.subr.mxu0 0.0
    %208 = vmatpush1.msra.mxu0 %v196
    %209 = vmatprep.subr.mxu0 0.0
    %210 = vmatpush1.msra.mxu0 %v195
    %211 = vmatprep.subr.mxu0 0.0
    %212 = vmatpush1.msra.mxu0 %v194
    %213 = vmatprep.subr.mxu0 0.0
    %214 = vmatpush1.msra.mxu0 %v193
    %215 = vmatprep.subr.mxu0 0.0
    %216 = vmatpush1.msra.mxu0 %v192
    %217 = vmatprep.subr.mxu0 0.0
    %218 = vmatpush1.msra.mxu0 %v191
    %219 = vmatprep.subr.mxu0 0.0
    %220 = vmatpush1.msra.mxu0 %v190
    %221 = vmatprep.subr.mxu0 0.0
    %222 = vmatpush1.msra.mxu0 %v189
    %223 = vmatprep.subr.mxu0 0.0
    %224 = vmatpush1.msra.mxu0 %v188
    %225 = vmatprep.subr.mxu0 0.0
    %226 = vmatpush1.msra.mxu0 %v187
    %227 = vmatprep.subr.mxu0 0.0
    %228 = vmatpush1.msra.mxu0 %v186
    %229 = vmatprep.subr.mxu0 0.0
    %230 = vmatpush1.msra.mxu0 %v185
    %231 = vmatprep.subr.mxu0 0.0
    %232 = vmatpush1.msra.mxu0 %v184
    %233 = vmatprep.subr.mxu0 0.0
    %234 = vmatpush2.msra.mxu0 0.0
    %235 = vmatprep.subr.mxu0 0.0
    %236 = vmatpush2.msra.mxu0 0.0
    %237 = vmatprep.subr.mxu0 0.0
    %238 = vmatpush2.msra.mxu0 0.0
    %239 = vmatprep.subr.mxu0 0.0
    %240 = vmatpush2.msra.mxu0 0.0
    %241 = vmatprep.subr.mxu0 0.0
    %242 = vmatpush2.msra.mxu0 0.0
    %243 = vmatprep.subr.mxu0 0.0
    %244 = vmatpush2.msra.mxu0 0.0
    %245 = vmatprep.subr.mxu0 0.0
    %246 = vmatpush2.msra.mxu0 0.0
    %247 = vmatprep.subr.mxu0 0.0
    %248 = vmatpush2.msra.mxu0 0.0
    %249 = vmatprep.subr.mxu0 0.0
    %250 = vmatpush2.msra.mxu0 0.0
    %251 = vmatprep.subr.mxu0 0.0
    %252 = vmatpush2.msra.mxu0 0.0
    %253 = vmatprep.subr.mxu0 0.0
    %254 = vmatpush2.msra.mxu0 0.0
    %255 = vmatprep.subr.mxu0 0.0
    %256 = vmatpush2.msra.mxu0 0.0
    %257 = vmatprep.subr.mxu0 0.0
    %258 = vmatpush2.msra.mxu0 0.0
    %259 = vmatprep.subr.mxu0 0.0
    %260 = vmatpush2.msra.mxu0 0.0
    %261 = vmatprep.subr.mxu0 0.0
    %262 = vmatpush2.msra.mxu0 0.0
    %263 = vmatprep.subr.mxu0 0.0
    %264 = vmatpush2.msra.mxu0 0.0
    %265 = vmatprep.mubr.f32.mxu0 0.0
    %266 = vmatmul.mubr.f32.gmra.mxu0 %v200
    %v267 = vpop.f32.mrf.mxu0
    %v268 = vadd.f32 0.0, %v267
    %v269 = vpop.f32.mrf.mxu0
    %270 = vdwg.mxu0
    %v271 = vadd.f32 %v146, %v268
    %v272 = vtanh.pop %v271
    %273 = vmatprep.subr.mxu0 0.0
    %274 = vmatpush1.msra.mxu0 %v199
    %275 = vmatprep.subr.mxu0 0.0
    %276 = vmatpush1.msra.mxu0 %v198
    %277 = vmatprep.subr.mxu0 0.0
    %278 = vmatpush1.msra.mxu0 %v197
    %279 = vmatprep.subr.mxu0 0.0
    %280 = vmatpush1.msra.mxu0 %v196
    %281 = vmatprep.subr.mxu0 0.0
    %282 = vmatpush1.msra.mxu0 %v195
    %283 = vmatprep.subr.mxu0 0.0
    %284 = vmatpush1.msra.mxu0 %v194
    %285 = vmatprep.subr.mxu0 0.0
    %286 = vmatpush1.msra.mxu0 %v193
    %287 = vmatprep.subr.mxu0 0.0
    %288 = vmatpush1.msra.mxu0 %v192
    %289 = vmatprep.subr.mxu0 0.0
    %290 = vmatpush1.msra.mxu0 %v191
    %291 = vmatprep.subr.mxu0 0.0
    %292 = vmatpush1.msra.mxu0 %v190
    %293 = vmatprep.subr.mxu0 0.0
    %294 = vmatpush1.msra.mxu0 %v189
    %295 = vmatprep.subr.mxu0 0.0
    %296 = vmatpush1.msra.mxu0 %v188
    %297 = vmatprep.subr.mxu0 0.0
    %298 = vmatpush1.msra.mxu0 %v187
    %299 = vmatprep.subr.mxu0 0.0
    %300 = vmatpush1.msra.mxu0 %v186
    %301 = vmatprep.subr.mxu0 0.0
    %302 = vmatpush1.msra.mxu0 %v185
    %303 = vmatprep.subr.mxu0 0.0
    %304 = vmatpush1.msra.mxu0 %v184
    %305 = vmatprep.subr.mxu0 0.0
    %306 = vmatpush2.msra.mxu0 0.0
    %307 = vmatprep.subr.mxu0 0.0
    %308 = vmatpush2.msra.mxu0 0.0
    %309 = vmatprep.subr.mxu0 0.0
    %310 = vmatpush2.msra.mxu0 0.0
    %311 = vmatprep.subr.mxu0 0.0
    %312 = vmatpush2.msra.mxu0 0.0
    %313 = vmatprep.subr.mxu0 0.0
    %314 = vmatpush2.msra.mxu0 0.0
    %315 = vmatprep.subr.mxu0 0.0
    %316 = vmatpush2.msra.mxu0 0.0
    %317 = vmatprep.subr.mxu0 0.0
    %318 = vmatpush2.msra.mxu0 0.0
    %319 = vmatprep.subr.mxu0 0.0
    %320 = vmatpush2.msra.mxu0 0.0
    %321 = vmatprep.subr.mxu0 0.0
    %322 = vmatpush2.msra.mxu0 0.0
    %323 = vmatprep.subr.mxu0 0.0
    %324 = vmatpush2.msra.mxu0 0.0
    %325 = vmatprep.subr.mxu0 0.0
    %326 = vmatpush2.msra.mxu0 0.0
    %327 = vmatprep.subr.mxu0 0.0
    %328 = vmatpush2.msra.mxu0 0.0
    %329 = vmatprep.subr.mxu0 0.0
    %330 = vmatpush2.msra.mxu0 0.0
    %331 = vmatprep.subr.mxu0 0.0
    %332 = vmatpush2.msra.mxu0 0.0
    %333 = vmatprep.subr.mxu0 0.0
    %334 = vmatpush2.msra.mxu0 0.0
    %335 = vmatprep.subr.mxu0 0.0
    %336 = vmatpush2.msra.mxu0 0.0
    %337 = vmatprep.mubr.f32.mxu0 0.0
    %338 = vmatmul.mubr.f32.gmra.mxu0 %v272
    %v339 = vpop.f32.mrf.mxu0
    %v340 = vadd.f32 0.0, %v339
    %v341 = vpop.f32.mrf.mxu0
    %342 = vdwg.mxu0
    %v343 = vadd.f32 %v151, %v340
    %v344 = vtanh.pop %v343
    %345 = vmatprep.subr.mxu0 0.0
    %346 = vmatpush1.msra.mxu0 %v199
    %347 = vmatprep.subr.mxu0 0.0
    %348 = vmatpush1.msra.mxu0 %v198
    %349 = vmatprep.subr.mxu0 0.0
    %350 = vmatpush1.msra.mxu0 %v197
    %351 = vmatprep.subr.mxu0 0.0
    %352 = vmatpush1.msra.mxu0 %v196
    %353 = vmatprep.subr.mxu0 0.0
    %354 = vmatpush1.msra.mxu0 %v195
    %355 = vmatprep.subr.mxu0 0.0
    %356 = vmatpush1.msra.mxu0 %v194
    %357 = vmatprep.subr.mxu0 0.0
    %358 = vmatpush1.msra.mxu0 %v193
    %359 = vmatprep.subr.mxu0 0.0
    %360 = vmatpush1.msra.mxu0 %v192
    %361 = vmatprep.subr.mxu0 0.0
    %362 = vmatpush1.msra.mxu0 %v191
    %363 = vmatprep.subr.mxu0 0.0
    %364 = vmatpush1.msra.mxu0 %v190
    %365 = vmatprep.subr.mxu0 0.0
    %366 = vmatpush1.msra.mxu0 %v189
    %367 = vmatprep.subr.mxu0 0.0
    %368 = vmatpush1.msra.mxu0 %v188
    %369 = vmatprep.subr.mxu0 0.0
    %370 = vmatpush1.msra.mxu0 %v187
    %371 = vmatprep.subr.mxu0 0.0
    %372 = vmatpush1.msra.mxu0 %v186
    %373 = vmatprep.subr.mxu0 0.0
    %374 = vmatpush1.msra.mxu0 %v185
    %375 = vmatprep.subr.mxu0 0.0
    %376 = vmatpush1.msra.mxu0 %v184
    %377 = vmatprep.subr.mxu0 0.0
    %378 = vmatpush2.msra.mxu0 0.0
    %379 = vmatprep.subr.mxu0 0.0
    %380 = vmatpush2.msra.mxu0 0.0
    %381 = vmatprep.subr.mxu0 0.0
    %382 = vmatpush2.msra.mxu0 0.0
    %383 = vmatprep.subr.mxu0 0.0
    %384 = vmatpush2.msra.mxu0 0.0
    %385 = vmatprep.subr.mxu0 0.0
    %386 = vmatpush2.msra.mxu0 0.0
    %387 = vmatprep.subr.mxu0 0.0
    %388 = vmatpush2.msra.mxu0 0.0
    %389 = vmatprep.subr.mxu0 0.0
    %390 = vmatpush2.msra.mxu0 0.0
    %391 = vmatprep.subr.mxu0 0.0
    %392 = vmatpush2.msra.mxu0 0.0
    %393 = vmatprep.subr.mxu0 0.0
    %394 = vmatpush2.msra.mxu0 0.0
    %395 = vmatprep.subr.mxu0 0.0
    %396 = vmatpush2.msra.mxu0 0.0
    %397 = vmatprep.subr.mxu0 0.0
    %398 = vmatpush2.msra.mxu0 0.0
    %399 = vmatprep.subr.mxu0 0.0
    %400 = vmatpush2.msra.mxu0 0.0
    %401 = vmatprep.subr.mxu0 0.0
    %402 = vmatpush2.msra.mxu0 0.0
    %403 = vmatprep.subr.mxu0 0.0
    %404 = vmatpush2.msra.mxu0 0.0
    %405 = vmatprep.subr.mxu0 0.0
    %406 = vmatpush2.msra.mxu0 0.0
    %407 = vmatprep.subr.mxu0 0.0
    %408 = vmatpush2.msra.mxu0 0.0
    %409 = vmatprep.mubr.f32.mxu0 0.0
    %410 = vmatmul.mubr.f32.gmra.mxu0 %v344
    %v411 = vpop.f32.mrf.mxu0
    %v412 = vadd.f32 0.0, %v411
    %v413 = vpop.f32.mrf.mxu0
    %414 = vdwg.mxu0
    %v415 = vadd.f32 %v156, %v412
    %v416 = vtanh.pop %v415
    %417 = vmatprep.subr.mxu0 0.0
    %418 = vmatpush1.msra.mxu0 %v199
    %419 = vmatprep.subr.mxu0 0.0
    %420 = vmatpush1.msra.mxu0 %v198
    %421 = vmatprep.subr.mxu0 0.0
    %422 = vmatpush1.msra.mxu0 %v197
    %423 = vmatprep.subr.mxu0 0.0
    %424 = vmatpush1.msra.mxu0 %v196
    %425 = vmatprep.subr.mxu0 0.0
    %426 = vmatpush1.msra.mxu0 %v195
    %427 = vmatprep.subr.mxu0 0.0
    %428 = vmatpush1.msra.mxu0 %v194
    %429 = vmatprep.subr.mxu0 0.0
    %430 = vmatpush1.msra.mxu0 %v193
    %431 = vmatprep.subr.mxu0 0.0
    %432 = vmatpush1.msra.mxu0 %v192
    %433 = vmatprep.subr.mxu0 0.0
    %434 = vmatpush1.msra.mxu0 %v191
    %435 = vmatprep.subr.mxu0 0.0
    %436 = vmatpush1.msra.mxu0 %v190
    %437 = vmatprep.subr.mxu0 0.0
    %438 = vmatpush1.msra.mxu0 %v189
    %439 = vmatprep.subr.mxu0 0.0
    %440 = vmatpush1.msra.mxu0 %v188
    %441 = vmatprep.subr.mxu0 0.0
    %442 = vmatpush1.msra.mxu0 %v187
    %443 = vmatprep.subr.mxu0 0.0
    %444 = vmatpush1.msra.mxu0 %v186
    %445 = vmatprep.subr.mxu0 0.0
    %446 = vmatpush1.msra.mxu0 %v185
    %447 = vmatprep.subr.mxu0 0.0
    %448 = vmatpush1.msra.mxu0 %v184
    %449 = vmatprep.subr.mxu0 0.0
    %450 = vmatpush2.msra.mxu0 0.0
    %451 = vmatprep.subr.mxu0 0.0
    %452 = vmatpush2.msra.mxu0 0.0
    %453 = vmatprep.subr.mxu0 0.0
    %454 = vmatpush2.msra.mxu0 0.0
    %455 = vmatprep.subr.mxu0 0.0
    %456 = vmatpush2.msra.mxu0 0.0
    %457 = vmatprep.subr.mxu0 0.0
    %458 = vmatpush2.msra.mxu0 0.0
    %459 = vmatprep.subr.mxu0 0.0
    %460 = vmatpush2.msra.mxu0 0.0
    %461 = vmatprep.subr.mxu0 0.0
    %462 = vmatpush2.msra.mxu0 0.0
    %463 = vmatprep.subr.mxu0 0.0
    %464 = vmatpush2.msra.mxu0 0.0
    %465 = vmatprep.subr.mxu0 0.0
    %466 = vmatpush2.msra.mxu0 0.0
    %467 = vmatprep.subr.mxu0 0.0
    %468 = vmatpush2.msra.mxu0 0.0
    %469 = vmatprep.subr.mxu0 0.0
    %470 = vmatpush2.msra.mxu0 0.0
    %471 = vmatprep.subr.mxu0 0.0
    %472 = vmatpush2.msra.mxu0 0.0
    %473 = vmatprep.subr.mxu0 0.0
    %474 = vmatpush2.msra.mxu0 0.0
    %475 = vmatprep.subr.mxu0 0.0
    %476 = vmatpush2.msra.mxu0 0.0
    %477 = vmatprep.subr.mxu0 0.0
    %478 = vmatpush2.msra.mxu0 0.0
    %479 = vmatprep.subr.mxu0 0.0
    %480 = vmatpush2.msra.mxu0 0.0
    %481 = vmatprep.mubr.f32.mxu0 0.0
    %482 = vmatmul.mubr.f32.gmra.mxu0 %v416
    %v483 = vpop.f32.mrf.mxu0
    %v484 = vadd.f32 0.0, %v483
    %v485 = vpop.f32.mrf.mxu0
    %486 = vdwg.mxu0
    %v487 = vadd.f32 %v161, %v484
    %v488 = vtanh.pop %v487
    %489 = vmatprep.subr.mxu0 0.0
    %490 = vmatpush1.msra.mxu0 %v199
    %491 = vmatprep.subr.mxu0 0.0
    %492 = vmatpush1.msra.mxu0 %v198
    %493 = vmatprep.subr.mxu0 0.0
    %494 = vmatpush1.msra.mxu0 %v197
    %495 = vmatprep.subr.mxu0 0.0
    %496 = vmatpush1.msra.mxu0 %v196
    %497 = vmatprep.subr.mxu0 0.0
    %498 = vmatpush1.msra.mxu0 %v195
    %499 = vmatprep.subr.mxu0 0.0
    %500 = vmatpush1.msra.mxu0 %v194
    %501 = vmatprep.subr.mxu0 0.0
    %502 = vmatpush1.msra.mxu0 %v193
    %503 = vmatprep.subr.mxu0 0.0
    %504 = vmatpush1.msra.mxu0 %v192
    %505 = vmatprep.subr.mxu0 0.0
    %506 = vmatpush1.msra.mxu0 %v191
    %507 = vmatprep.subr.mxu0 0.0
    %508 = vmatpush1.msra.mxu0 %v190
    %509 = vmatprep.subr.mxu0 0.0
    %510 = vmatpush1.msra.mxu0 %v189
    %511 = vmatprep.subr.mxu0 0.0
    %512 = vmatpush1.msra.mxu0 %v188
    %513 = vmatprep.subr.mxu0 0.0
    %514 = vmatpush1.msra.mxu0 %v187
    %515 = vmatprep.subr.mxu0 0.0
    %516 = vmatpush1.msra.mxu0 %v186
    %517 = vmatprep.subr.mxu0 0.0
    %518 = vmatpush1.msra.mxu0 %v185
    %519 = vmatprep.subr.mxu0 0.0
    %520 = vmatpush1.msra.mxu0 %v184
    %521 = vmatprep.subr.mxu0 0.0
    %522 = vmatpush2.msra.mxu0 0.0
    %523 = vmatprep.subr.mxu0 0.0
    %524 = vmatpush2.msra.mxu0 0.0
    %525 = vmatprep.subr.mxu0 0.0
    %526 = vmatpush2.msra.mxu0 0.0
    %527 = vmatprep.subr.mxu0 0.0
    %528 = vmatpush2.msra.mxu0 0.0
    %529 = vmatprep.subr.mxu0 0.0
    %530 = vmatpush2.msra.mxu0 0.0
    %531 = vmatprep.subr.mxu0 0.0
    %532 = vmatpush2.msra.mxu0 0.0
    %533 = vmatprep.subr.mxu0 0.0
    %534 = vmatpush2.msra.mxu0 0.0
    %535 = vmatprep.subr.mxu0 0.0
    %536 = vmatpush2.msra.mxu0 0.0
    %537 = vmatprep.subr.mxu0 0.0
    %538 = vmatpush2.msra.mxu0 0.0
    %539 = vmatprep.subr.mxu0 0.0
    %540 = vmatpush2.msra.mxu0 0.0
    %541 = vmatprep.subr.mxu0 0.0
    %542 = vmatpush2.msra.mxu0 0.0
    %543 = vmatprep.subr.mxu0 0.0
    %544 = vmatpush2.msra.mxu0 0.0
    %545 = vmatprep.subr.mxu0 0.0
    %546 = vmatpush2.msra.mxu0 0.0
    %547 = vmatprep.subr.mxu0 0.0
    %548 = vmatpush2.msra.mxu0 0.0
    %549 = vmatprep.subr.mxu0 0.0
    %550 = vmatpush2.msra.mxu0 0.0
    %551 = vmatprep.subr.mxu0 0.0
    %552 = vmatpush2.msra.mxu0 0.0
    %553 = vmatprep.mubr.f32.mxu0 0.0
    %554 = vmatmul.mubr.f32.gmra.mxu0 %v488
    %v555 = vpop.f32.mrf.mxu0
    %v556 = vadd.f32 0.0, %v555
    %v557 = vpop.f32.mrf.mxu0
    %558 = vdwg.mxu0
    %v559 = vadd.f32 %v166, %v556
    %v560 = vtanh.pop %v559
    %561 = vmatprep.subr.mxu0 0.0
    %562 = vmatpush1.msra.mxu0 %v199
    %563 = vmatprep.subr.mxu0 0.0
    %564 = vmatpush1.msra.mxu0 %v198
    %565 = vmatprep.subr.mxu0 0.0
    %566 = vmatpush1.msra.mxu0 %v197
    %567 = vmatprep.subr.mxu0 0.0
    %568 = vmatpush1.msra.mxu0 %v196
    %569 = vmatprep.subr.mxu0 0.0
    %570 = vmatpush1.msra.mxu0 %v195
    %571 = vmatprep.subr.mxu0 0.0
    %572 = vmatpush1.msra.mxu0 %v194
    %573 = vmatprep.subr.mxu0 0.0
    %574 = vmatpush1.msra.mxu0 %v193
    %575 = vmatprep.subr.mxu0 0.0
    %576 = vmatpush1.msra.mxu0 %v192
    %577 = vmatprep.subr.mxu0 0.0
    %578 = vmatpush1.msra.mxu0 %v191
    %579 = vmatprep.subr.mxu0 0.0
    %580 = vmatpush1.msra.mxu0 %v190
    %581 = vmatprep.subr.mxu0 0.0
    %582 = vmatpush1.msra.mxu0 %v189
    %583 = vmatprep.subr.mxu0 0.0
    %584 = vmatpush1.msra.mxu0 %v188
    %585 = vmatprep.subr.mxu0 0.0
    %586 = vmatpush1.msra.mxu0 %v187
    %587 = vmatprep.subr.mxu0 0.0
    %588 = vmatpush1.msra.mxu0 %v186
    %589 = vmatprep.subr.mxu0 0.0
    %590 = vmatpush1.msra.mxu0 %v185
    %591 = vmatprep.subr.mxu0 0.0
    %592 = vmatpush1.msra.mxu0 %v184
    %593 = vmatprep.subr.mxu0 0.0
    %594 = vmatpush2.msra.mxu0 0.0
    %595 = vmatprep.subr.mxu0 0.0
    %596 = vmatpush2.msra.mxu0 0.0
    %597 = vmatprep.subr.mxu0 0.0
    %598 = vmatpush2.msra.mxu0 0.0
    %599 = vmatprep.subr.mxu0 0.0
    %600 = vmatpush2.msra.mxu0 0.0
    %601 = vmatprep.subr.mxu0 0.0
    %602 = vmatpush2.msra.mxu0 0.0
    %603 = vmatprep.subr.mxu0 0.0
    %604 = vmatpush2.msra.mxu0 0.0
    %605 = vmatprep.subr.mxu0 0.0
    %606 = vmatpush2.msra.mxu0 0.0
    %607 = vmatprep.subr.mxu0 0.0
    %608 = vmatpush2.msra.mxu0 0.0
    %609 = vmatprep.subr.mxu0 0.0
    %610 = vmatpush2.msra.mxu0 0.0
    %611 = vmatprep.subr.mxu0 0.0
    %612 = vmatpush2.msra.mxu0 0.0
    %613 = vmatprep.subr.mxu0 0.0
    %614 = vmatpush2.msra.mxu0 0.0
    %615 = vmatprep.subr.mxu0 0.0
    %616 = vmatpush2.msra.mxu0 0.0
    %617 = vmatprep.subr.mxu0 0.0
    %618 = vmatpush2.msra.mxu0 0.0
    %619 = vmatprep.subr.mxu0 0.0
    %620 = vmatpush2.msra.mxu0 0.0
    %621 = vmatprep.subr.mxu0 0.0
    %622 = vmatpush2.msra.mxu0 0.0
    %623 = vmatprep.subr.mxu0 0.0
    %624 = vmatpush2.msra.mxu0 0.0
    %625 = vmatprep.mubr.f32.mxu0 0.0
    %626 = vmatmul.mubr.f32.gmra.mxu0 %v560
    %v627 = vpop.f32.mrf.mxu0
    %v628 = vadd.f32 0.0, %v627
    %v629 = vpop.f32.mrf.mxu0
    %630 = vdwg.mxu0
    %v631 = vadd.f32 %v171, %v628
    %v632 = vtanh.pop %v631
    %633 = vmatprep.subr.mxu0 0.0
    %634 = vmatpush1.msra.mxu0 %v199
    %635 = vmatprep.subr.mxu0 0.0
    %636 = vmatpush1.msra.mxu0 %v198
    %637 = vmatprep.subr.mxu0 0.0
    %638 = vmatpush1.msra.mxu0 %v197
    %639 = vmatprep.subr.mxu0 0.0
    %640 = vmatpush1.msra.mxu0 %v196
    %641 = vmatprep.subr.mxu0 0.0
    %642 = vmatpush1.msra.mxu0 %v195
    %643 = vmatprep.subr.mxu0 0.0
    %644 = vmatpush1.msra.mxu0 %v194
    %645 = vmatprep.subr.mxu0 0.0
    %646 = vmatpush1.msra.mxu0 %v193
    %647 = vmatprep.subr.mxu0 0.0
    %648 = vmatpush1.msra.mxu0 %v192
    %649 = vmatprep.subr.mxu0 0.0
    %650 = vmatpush1.msra.mxu0 %v191
    %651 = vmatprep.subr.mxu0 0.0
    %652 = vmatpush1.msra.mxu0 %v190
    %653 = vmatprep.subr.mxu0 0.0
    %654 = vmatpush1.msra.mxu0 %v189
    %655 = vmatprep.subr.mxu0 0.0
    %656 = vmatpush1.msra.mxu0 %v188
    %657 = vmatprep.subr.mxu0 0.0
    %658 = vmatpush1.msra.mxu0 %v187
    %659 = vmatprep.subr.mxu0 0.0
    %660 = vmatpush1.msra.mxu0 %v186
    %661 = vmatprep.subr.mxu0 0.0
    %662 = vmatpush1.msra.mxu0 %v185
    %663 = vmatprep.subr.mxu0 0.0
    %664 = vmatpush1.msra.mxu0 %v184
    %665 = vmatprep.subr.mxu0 0.0
    %666 = vmatpush2.msra.mxu0 0.0
    %667 = vmatprep.subr.mxu0 0.0
    %668 = vmatpush2.msra.mxu0 0.0
    %669 = vmatprep.subr.mxu0 0.0
    %670 = vmatpush2.msra.mxu0 0.0
    %671 = vmatprep.subr.mxu0 0.0
    %672 = vmatpush2.msra.mxu0 0.0
    %673 = vmatprep.subr.mxu0 0.0
    %674 = vmatpush2.msra.mxu0 0.0
    %675 = vmatprep.subr.mxu0 0.0
    %676 = vmatpush2.msra.mxu0 0.0
    %677 = vmatprep.subr.mxu0 0.0
    %678 = vmatpush2.msra.mxu0 0.0
    %679 = vmatprep.subr.mxu0 0.0
    %680 = vmatpush2.msra.mxu0 0.0
    %681 = vmatprep.subr.mxu0 0.0
    %682 = vmatpush2.msra.mxu0 0.0
    %683 = vmatprep.subr.mxu0 0.0
    %684 = vmatpush2.msra.mxu0 0.0
    %685 = vmatprep.subr.mxu0 0.0
    %686 = vmatpush2.msra.mxu0 0.0
    %687 = vmatprep.subr.mxu0 0.0
    %688 = vmatpush2.msra.mxu0 0.0
    %689 = vmatprep.subr.mxu0 0.0
    %690 = vmatpush2.msra.mxu0 0.0
    %691 = vmatprep.subr.mxu0 0.0
    %692 = vmatpush2.msra.mxu0 0.0
    %693 = vmatprep.subr.mxu0 0.0
    %694 = vmatpush2.msra.mxu0 0.0
    %695 = vmatprep.subr.mxu0 0.0
    %696 = vmatpush2.msra.mxu0 0.0
    %697 = vmatprep.mubr.f32.mxu0 0.0
    %698 = vmatmul.mubr.f32.gmra.mxu0 %v632
    %v699 = vpop.f32.mrf.mxu0
    %v700 = vadd.f32 0.0, %v699
    %v701 = vpop.f32.mrf.mxu0
    %702 = vdwg.mxu0
    %v703 = vadd.f32 %v176, %v700
    %v704 = vtanh.pop %v703
    %705 = vmatprep.subr.mxu0 0.0
    %706 = vmatpush1.msra.mxu0 %v199
    %707 = vmatprep.subr.mxu0 0.0
    %708 = vmatpush1.msra.mxu0 %v198
    %709 = vmatprep.subr.mxu0 0.0
    %710 = vmatpush1.msra.mxu0 %v197
    %711 = vmatprep.subr.mxu0 0.0
    %712 = vmatpush1.msra.mxu0 %v196
    %713 = vmatprep.subr.mxu0 0.0
    %714 = vmatpush1.msra.mxu0 %v195
    %715 = vmatprep.subr.mxu0 0.0
    %716 = vmatpush1.msra.mxu0 %v194
    %717 = vmatprep.subr.mxu0 0.0
    %718 = vmatpush1.msra.mxu0 %v193
    %719 = vmatprep.subr.mxu0 0.0
    %720 = vmatpush1.msra.mxu0 %v192
    %721 = vmatprep.subr.mxu0 0.0
    %722 = vmatpush1.msra.mxu0 %v191
    %723 = vmatprep.subr.mxu0 0.0
    %724 = vmatpush1.msra.mxu0 %v190
    %725 = vmatprep.subr.mxu0 0.0
    %726 = vmatpush1.msra.mxu0 %v189
    %727 = vmatprep.subr.mxu0 0.0
    %728 = vmatpush1.msra.mxu0 %v188
    %729 = vmatprep.subr.mxu0 0.0
    %730 = vmatpush1.msra.mxu0 %v187
    %731 = vmatprep.subr.mxu0 0.0
    %732 = vmatpush1.msra.mxu0 %v186
    %733 = vmatprep.subr.mxu0 0.0
    %734 = vmatpush1.msra.mxu0 %v185
    %735 = vmatprep.subr.mxu0 0.0
    %736 = vmatpush1.msra.mxu0 %v184
    %737 = vmatprep.subr.mxu0 0.0
    %738 = vmatpush2.msra.mxu0 0.0
    %739 = vmatprep.subr.mxu0 0.0
    %740 = vmatpush2.msra.mxu0 0.0
    %741 = vmatprep.subr.mxu0 0.0
    %742 = vmatpush2.msra.mxu0 0.0
    %743 = vmatprep.subr.mxu0 0.0
    %744 = vmatpush2.msra.mxu0 0.0
    %745 = vmatprep.subr.mxu0 0.0
    %746 = vmatpush2.msra.mxu0 0.0
    %747 = vmatprep.subr.mxu0 0.0
    %748 = vmatpush2.msra.mxu0 0.0
    %749 = vmatprep.subr.mxu0 0.0
    %750 = vmatpush2.msra.mxu0 0.0
    %751 = vmatprep.subr.mxu0 0.0
    %752 = vmatpush2.msra.mxu0 0.0
    %753 = vmatprep.subr.mxu0 0.0
    %754 = vmatpush2.msra.mxu0 0.0
    %755 = vmatprep.subr.mxu0 0.0
    %756 = vmatpush2.msra.mxu0 0.0
    %757 = vmatprep.subr.mxu0 0.0
    %758 = vmatpush2.msra.mxu0 0.0
    %759 = vmatprep.subr.mxu0 0.0
    %760 = vmatpush2.msra.mxu0 0.0
    %761 = vmatprep.subr.mxu0 0.0
    %762 = vmatpush2.msra.mxu0 0.0
    %763 = vmatprep.subr.mxu0 0.0
    %764 = vmatpush2.msra.mxu0 0.0
    %765 = vmatprep.subr.mxu0 0.0
    %766 = vmatpush2.msra.mxu0 0.0
    %767 = vmatprep.subr.mxu0 0.0
    %768 = vmatpush2.msra.mxu0 0.0
    %769 = vmatprep.mubr.f32.mxu0 0.0
    %770 = vmatmul.mubr.f32.gmra.mxu0 %v704
    %v771 = vpop.f32.mrf.mxu0
    %v772 = vadd.f32 0.0, %v771
    %v773 = vpop.f32.mrf.mxu0
    %774 = vdwg.mxu0
    %v775 = vadd.f32 %v181, %v772
    %v776 = vtanh.pop %v775
    %777 = vst [vmem:[#allocation2] sm:$0xff] %v776
    // Predicated region
    $region26: #{tpu_custom_call.1} parent=1 // pred_check
      %p778 = pneg %p32
    $region27: #{tpu_custom_call.1} parent=1 // pred_check_branch
      %780 = sbr.rel (%p778) target = $region29
    $region28: #{tpu_custom_call.1} parent=1 // pred_region
      %781 = vst [vmem:[#allocation6] sm:$0xff] %v776
    $region29: #{tpu_custom_call.1} parent=1 // pred_fallthru
      _
    // Predicated region
    $region30: #{tpu_custom_call.1} parent=1 // pred_check
      _
    $region31: #{tpu_custom_call.1} parent=1 // pred_check_branch
      %783 = sbr.rel (0) target = $region33
    $region32: #{tpu_custom_call.1} parent=1 // pred_region
      %s785 = ssub.s32 128, 128
      %786 = vsyncadd [#allocation5], %s785
      %s788 = sshll.u32 [#allocation6], 4
      %s789 = int_to_ptr.vmem [resolvable:$true] %s788
      %791 = dma.vmem_to_hbm [thread:$0]  %s789, 128, %s4, [#allocation5]
    $region33: #{tpu_custom_call.1} parent=1 // pred_fallthru
      _
    // Predicated region
    $region34: #{tpu_custom_call.1} parent=1 // pred_check
      _
    $region35: #{tpu_custom_call.1} parent=1 // pred_check_branch
      %793 = sbr.rel (0) target = $region37
    $region36: #{tpu_custom_call.1} parent=1 // pred_region
      %794 = dma.done [#allocation5], 128
    $region37: #{tpu_custom_call.1} parent=1 // pred_fallthru
      _
    %795 = vsyncpa [#allocation4], 1
    %796 = vsyncpa [#allocation5], 1

</llo_original>
